<compile_context>
chip_gen: v5e
topology: v5e:2x2
jax: 0.10.0
libtpu: 0.0.40
codegen_flags: <defaults>
</compile_context>

<pallas_src>
import jax
import jax.numpy as jnp
from jax.experimental import pallas as pl
from jax.experimental.pallas import tpu as pltpu


def _fused_2d3d_kernel(x_ref, o_ref):
    # x_ref / o_ref: one (r_tile, L) lane-dense slab of the flattened tensor.
    # rearrange -> aug(identity) -> inverse rearrange collapses to a copy.
    o_ref[...] = x_ref[...]


def _pick_lane_width(total, hw, cap=32768):
    """Largest multiple of 128 that divides `total` (capped), for a fully
    lane-dense trailing axis.  Falls back to H*W (full-extent last dim is
    always legal) when `total` has no factor that is a multiple of 128."""
    l = cap - (cap % 128)
    while l >= 128:
        if total % l == 0:
            return l
        l -= 128
    return hw


def _pick_row_tile(rows, bytes_per_row, budget_bytes=2 << 20):
    """Largest row tile dividing `rows` that (a) is layout-legal (== rows or a
    multiple of 8) and (b) keeps one block under ~2 MiB, so double-buffered
    in+out blocks stay well inside scoped VMEM on v5e/v6e/v7x."""
    candidates = [r for r in range(rows, 0, -1)
                  if rows % r == 0 and (r == rows or r % 8 == 0)]
    for r in candidates:
        if r * bytes_per_row <= budget_bytes:
            return r
    return candidates[-1]


def base_2d_to_3d(x):
    """Pallas implementation of Base2dTo3d.forward (aug == identity)."""
    assert x.ndim == 5, "len of x.shape should be 5, i.e., B,C,D,H,W"
    B, C, D, H, W = x.shape
    HW = H * W
    total = B * C * D * HW

    # Free reshape (row-major contiguity) to a lane-dense 2-D view.
    L = _pick_lane_width(total, HW)
    if total % L != 0:            # only possible via the HW fallback
        L = HW
    R = total // L
    x2 = x.reshape(R, L)

    itemsize = jnp.dtype(x.dtype).itemsize
    r_tile = _pick_row_tile(R, L * itemsize)
    grid = (R // r_tile,)

    out2 = pl.pallas_call(
        _fused_2d3d_kernel,
        out_shape=jax.ShapeDtypeStruct((R, L), x.dtype),
        grid_spec=pltpu.PrefetchScalarGridSpec(
            num_scalar_prefetch=0,
            grid=grid,
            in_specs=[pl.BlockSpec((r_tile, L), lambda i: (i, 0))],
            out_specs=pl.BlockSpec((r_tile, L), lambda i: (i, 0)),
        ),
        compiler_params=pltpu.CompilerParams(
            dimension_semantics=("parallel",),
        ),
    )(x2)

    return out2.reshape(B, C, D, H, W)


if __name__ == "__main__":
    key = jax.random.PRNGKey(0)
    B, C, D, H, W = 2, 4, 8, 16, 16
    x = jax.random.normal(key, (B, C, D, H, W), dtype=jnp.float32)

    out = jax.block_until_ready(base_2d_to_3d(x))

    # Reference in plain JAX: rearrange -> identity aug -> inverse rearrange.
    ref_2d = jnp.transpose(x, (0, 2, 1, 3, 4)).reshape(B * D, C, H, W)
    ref = jnp.transpose(ref_2d.reshape(B, D, C, H, W), (0, 2, 1, 3, 4))

    assert out.shape == (B, C, D, H, W)
    assert out.dtype == x.dtype
    assert jnp.array_equal(out, ref)
    assert jnp.array_equal(out, x)  # identity aug => whole pipeline is identity

    print("KERNEL_OK")
</pallas_src>

<mosaic_0001>
module attributes {stable_mosaic.version = 11 : i64} {
  func.func @_fused_2d3d_kernel(%arg0: i32, %arg1: memref<1x16384xf32, #tpu.memory_space<vmem>>, %arg2: memref<1x16384xf32, #tpu.memory_space<vmem>>) attributes {dimension_semantics = [#tpu.dimension_semantics<parallel>], iteration_bounds = array<i64: 1>, scalar_prefetch = 0 : i64, scratch_operands = 0 : i64, tpu.core_type = #tpu.core_type<tc>, window_params = [{transform_indices = @transform_0, window_bounds = array<i64: 1, 16384>}, {transform_indices = @transform_1, window_bounds = array<i64: 1, 16384>}]} {
    %c0 = arith.constant 0 : index
    %c0_0 = arith.constant 0 : index
    %0 = vector.load %arg1[%c0, %c0_0] : memref<1x16384xf32, #tpu.memory_space<vmem>>, vector<1x16384xf32>
    %c0_1 = arith.constant 0 : index
    %c0_2 = arith.constant 0 : index
    %1 = vector.load %arg2[%c0_1, %c0_2] : memref<1x16384xf32, #tpu.memory_space<vmem>>, vector<1x16384xf32>
    tpu.vector_store %arg2[%c0_1, %c0_2], %0 {strides = array<i32>} : memref<1x16384xf32, #tpu.memory_space<vmem>>, vector<1x16384xf32>,
    return
  }
  func.func @transform_0(%arg0: i32) -> (i32, i32) {
    %c0_i32 = arith.constant 0 : i32
    %c0_i32_0 = arith.constant 0 : i32
    return %arg0, %c0_i32 : i32, i32
  }
  func.func @transform_1(%arg0: i32) -> (i32, i32) {
    %c0_i32 = arith.constant 0 : i32
    %c0_i32_0 = arith.constant 0 : i32
    return %arg0, %c0_i32 : i32, i32
  }
}

</mosaic_0001>

<llo_original>
// kernel: tpu_custom_call.1
$region0: #{tpu_custom_call.1}
  #allocation0 [shape = 'u32[]', space=smem, size = 0x4, offset = 0x4, fixed_abs, tag = 'smem constant byte address 0x4 - core index']
  #allocation1 [shape = 'u32[72,128]{1,0:T(1,128)}', space=vmem, size = 0x9000, scoped, tag = 'internal scratch']
  %s0 = inlined_call_operand.hbm [shape: f32[1,16384], index: 0, kind: input, shape index: {}]
  %s1 = inlined_call_operand.hbm [shape: f32[1,16384], index: 1, kind: output, shape index: {}]
  %s2 = sld [smem:[#allocation0]]
  $region18: #{tpu_custom_call.1} parent=0
    _
  %s4 = ssub.s32 1, %s2
  %s5 = scalar_select 0, %s4, %s2
  $region1: #{tpu_custom_call.1} parent=0
    #allocation2 [shape = 'u8[65536]{0}', space=vmem, size = 0x10000, scoped, tag = 'input window, operand 0, single buffered']
    #allocation3 [shape = 's32[1]{0}', space=sflag, size = 0x4, scoped, tag = 'scoped memory for tpu_custom_call.1']
    #allocation4 [shape = 's32[1]{0}', space=sflag, size = 0x4, scoped, tag = 'scoped memory for tpu_custom_call.1']
    #allocation5 [shape = 'u8[65536]{0}', space=vmem, size = 0x10000, scoped, tag = 'output window, operand 0, single buffered']
    %6 = vsyncpa [#allocation3], 0
    %7 = vsyncpa [#allocation4], 0
    // Predicated region
    $region2: #{tpu_custom_call.1} parent=1 // pred_check
      _
    $region3: #{tpu_custom_call.1} parent=1 // pred_check_branch
      %9 = sbr.rel (0) target = $region5
    $region4: #{tpu_custom_call.1} parent=1 // pred_region
      %11 = vsyncadd [#allocation3], 0
      %s13 = sshll.u32 %s0, 4
      %s14 = int_to_ptr.hbm [resolvable:$true] %s13
      %s15 = sshll.u32 [#allocation2], 4
      %s16 = int_to_ptr.vmem [resolvable:$true] %s15
      %18 = dma.hbm_to_vmem [thread:$0]  %s14, 2048, %s16, [#allocation3]
    $region5: #{tpu_custom_call.1} parent=1 // pred_fallthru
      _
    // Predicated region
    $region6: #{tpu_custom_call.1} parent=1 // pred_check
      _
    $region7: #{tpu_custom_call.1} parent=1 // pred_check_branch
      %20 = sbr.rel (0) target = $region9
    $region8: #{tpu_custom_call.1} parent=1 // pred_region
      %22 = dma.done [#allocation3], 2048
    $region9: #{tpu_custom_call.1} parent=1 // pred_fallthru
      _
    %v23 = vld [vmem:[#allocation2] sm:$0xff]
    %v24 = vld [vmem:[#allocation2 + $0x8] sm:$0xff]
    %v25 = vld [vmem:[#allocation2 + $0x10] sm:$0xff]
    %v26 = vld [vmem:[#allocation2 + $0x18] sm:$0xff]
    %v27 = vld [vmem:[#allocation2 + $0x20] sm:$0xff]
    %v28 = vld [vmem:[#allocation2 + $0x28] sm:$0xff]
    %v29 = vld [vmem:[#allocation2 + $0x30] sm:$0xff]
    %v30 = vld [vmem:[#allocation2 + $0x38] sm:$0xff]
    %v31 = vld [vmem:[#allocation2 + $0x40] sm:$0xff]
    %v32 = vld [vmem:[#allocation2 + $0x48] sm:$0xff]
    %v33 = vld [vmem:[#allocation2 + $0x50] sm:$0xff]
    %v34 = vld [vmem:[#allocation2 + $0x58] sm:$0xff]
    %v35 = vld [vmem:[#allocation2 + $0x60] sm:$0xff]
    %v36 = vld [vmem:[#allocation2 + $0x68] sm:$0xff]
    %v37 = vld [vmem:[#allocation2 + $0x70] sm:$0xff]
    %v38 = vld [vmem:[#allocation2 + $0x78] sm:$0xff]
    %39 = vst [vmem:[#allocation5] sm:$0xff] %v23
    %40 = vst [vmem:[#allocation5 + $0x8] sm:$0xff] %v24
    %41 = vst [vmem:[#allocation5 + $0x10] sm:$0xff] %v25
    %42 = vst [vmem:[#allocation5 + $0x18] sm:$0xff] %v26
    %43 = vst [vmem:[#allocation5 + $0x20] sm:$0xff] %v27
    %44 = vst [vmem:[#allocation5 + $0x28] sm:$0xff] %v28
    %45 = vst [vmem:[#allocation5 + $0x30] sm:$0xff] %v29
    %46 = vst [vmem:[#allocation5 + $0x38] sm:$0xff] %v30
    %47 = vst [vmem:[#allocation5 + $0x40] sm:$0xff] %v31
    %48 = vst [vmem:[#allocation5 + $0x48] sm:$0xff] %v32
    %49 = vst [vmem:[#allocation5 + $0x50] sm:$0xff] %v33
    %50 = vst [vmem:[#allocation5 + $0x58] sm:$0xff] %v34
    %51 = vst [vmem:[#allocation5 + $0x60] sm:$0xff] %v35
    %52 = vst [vmem:[#allocation5 + $0x68] sm:$0xff] %v36
    %53 = vst [vmem:[#allocation5 + $0x70] sm:$0xff] %v37
    %54 = vst [vmem:[#allocation5 + $0x78] sm:$0xff] %v38
    // Predicated region
    $region10: #{tpu_custom_call.1} parent=1 // pred_check
      _
    $region11: #{tpu_custom_call.1} parent=1 // pred_check_branch
      %56 = sbr.rel (0) target = $region13
    $region12: #{tpu_custom_call.1} parent=1 // pred_region
      %58 = vsyncadd [#allocation4], 0
      %s60 = sshll.u32 [#allocation5], 4
      %s61 = int_to_ptr.vmem [resolvable:$true] %s60
      %s62 = sshll.u32 %s1, 4
      %s63 = int_to_ptr.hbm [resolvable:$true] %s62
      %65 = dma.vmem_to_hbm [thread:$0]  %s61, 2048, %s63, [#allocation4]
    $region13: #{tpu_custom_call.1} parent=1 // pred_fallthru
      _
    // Predicated region
    $region14: #{tpu_custom_call.1} parent=1 // pred_check
      _
    $region15: #{tpu_custom_call.1} parent=1 // pred_check_branch
      %67 = sbr.rel (0) target = $region17
    $region16: #{tpu_custom_call.1} parent=1 // pred_region
      %69 = dma.done [#allocation4], 2048
    $region17: #{tpu_custom_call.1} parent=1 // pred_fallthru
      _
    %70 = vsyncpa [#allocation3], 1
    %71 = vsyncpa [#allocation4], 1

</llo_original>
